<compile_context>
chip_gen: v7x
topology: tpu7x:2x2x1
jax: 0.10.0
libtpu: 0.0.40
codegen_flags: <defaults>
</compile_context>

<pallas_src>
import jax
import jax.numpy as jnp
from jax.experimental import pallas as pl
from jax.experimental.pallas import tpu as pltpu

# True model dims (from RL/model.py)
N_STATE = 300
HIDDEN = 250
N_ACTION = 4  # stand-in for len(action_space); must be > 0 to emit a kernel

# Hardware-padded dims (zero padding is inert through matmul + ReLU)
N_STATE_PAD = 384   # 300 -> 3 * 128 lanes
HIDDEN_PAD = 256    # 250 -> one 256x256 MXU tile (v6e/v7x), two 128x128 (v5e)
N_OUT_PAD = 128     # lane-dense output block; true logits are [:, :N_ACTION]


def _round_up(x, m):
    return ((x + m - 1) // m) * m


def _mlp_kernel(x_ref, w1_ref, b1_ref, w2_ref, b2_ref, w3_ref, b3_ref, o_ref):
    """Fused 3-layer MLP on one (TB, N_STATE_PAD) batch tile.

    bf16 matmul operands -> f32 MXU accumulation; bias-add / ReLU in f32.
    """
    x = x_ref[...].astype(jnp.bfloat16)
    h1 = jnp.dot(x, w1_ref[...], preferred_element_type=jnp.float32) + b1_ref[...]
    h1 = jnp.maximum(h1, 0.0)                                   # ReLU (f32)
    h2 = jnp.dot(h1.astype(jnp.bfloat16), w2_ref[...],
                 preferred_element_type=jnp.float32) + b2_ref[...]
    h2 = jnp.maximum(h2, 0.0)                                   # ReLU (f32)
    out = jnp.dot(h2.astype(jnp.bfloat16), w3_ref[...],
                  preferred_element_type=jnp.float32) + b3_ref[...]
    o_ref[...] = out.astype(o_ref.dtype)


def network_forward(x, params):
    """x: (B, N_STATE) float32; params: padded (w1, b1, w2, b2, w3, b3).

    Returns (B, N_ACTION) float32 logits.
    """
    w1, b1, w2, b2, w3, b3 = params
    B, feat = x.shape
    assert feat == N_STATE, feat

    # Batch tile: multiple of 8 (f32 sublane), capped at 256 so double-buffered
    # x/out tiles + resident weights stay far below v7x's 32 MiB scoped VMEM.
    TB = min(256, _round_up(B, 8))
    B_pad = _round_up(B, TB)
    grid = (B_pad // TB,)

    # Zero-pad batch and feature dims for aligned, unmasked vector loads.
    x_pad = jnp.pad(x.astype(jnp.float32),
                    ((0, B_pad - B), (0, N_STATE_PAD - N_STATE)))

    const = lambda i: (0, 0)   # weights/biases: same block every grid step

    flops = 2 * B_pad * (N_STATE_PAD * HIDDEN_PAD
                         + HIDDEN_PAD * HIDDEN_PAD
                         + HIDDEN_PAD * N_OUT_PAD)
    bytes_accessed = (x_pad.size * 4 + B_pad * N_OUT_PAD * 4
                      + (w1.size + w2.size + w3.size) * 2      # bf16 weights
                      + (b1.size + b2.size + b3.size) * 4)     # f32 biases

    out_pad = pl.pallas_call(
        _mlp_kernel,
        out_shape=jax.ShapeDtypeStruct((B_pad, N_OUT_PAD), jnp.float32),
        grid_spec=pltpu.PrefetchScalarGridSpec(
            num_scalar_prefetch=0,
            grid=grid,
            in_specs=[
                pl.BlockSpec((TB, N_STATE_PAD), lambda i: (i, 0)),      # x tile
                pl.BlockSpec((N_STATE_PAD, HIDDEN_PAD), const),         # w1
                pl.BlockSpec((1, HIDDEN_PAD), const),                   # b1
                pl.BlockSpec((HIDDEN_PAD, HIDDEN_PAD), const),          # w2
                pl.BlockSpec((1, HIDDEN_PAD), const),                   # b2
                pl.BlockSpec((HIDDEN_PAD, N_OUT_PAD), const),           # w3
                pl.BlockSpec((1, N_OUT_PAD), const),                    # b3
            ],
            out_specs=pl.BlockSpec((TB, N_OUT_PAD), lambda i: (i, 0)),
        ),
        compiler_params=pltpu.CompilerParams(
            dimension_semantics=("parallel",),      # megacore-shard batch tiles
            vmem_limit_bytes=32 * 1024 * 1024,      # safe on v7x's smaller VMEM
        ),
        cost_estimate=pl.CostEstimate(
            flops=flops, transcendentals=0, bytes_accessed=bytes_accessed),
    )(x_pad, w1, b1, w2, b2, w3, b3)

    # Slice off batch + lane padding outside the kernel (cheap XLA slice).
    return out_pad[:B, :N_ACTION]


def init_params(key):
    """Init mirroring the PyTorch module: weights ~ Normal(0.001, 0.1), biases
    use PyTorch's default Linear init Uniform(-1/sqrt(fan_in), 1/sqrt(fan_in)).
    Weights are zero-padded to the hardware dims and stored in bf16; biases are
    zero-padded and kept in f32 (they add to the f32 accumulator)."""
    ks = jax.random.split(key, 6)

    def w_init(k, fan_in, fan_out, pad_in, pad_out):
        w = 0.001 + 0.1 * jax.random.normal(k, (fan_in, fan_out), dtype=jnp.float32)
        w = jnp.pad(w, ((0, pad_in - fan_in), (0, pad_out - fan_out)))
        return w.astype(jnp.bfloat16)

    def b_init(k, fan_in, fan_out, pad_out):
        bound = 1.0 / (float(fan_in) ** 0.5)
        b = jax.random.uniform(k, (1, fan_out), minval=-bound, maxval=bound,
                               dtype=jnp.float32)
        return jnp.pad(b, ((0, 0), (0, pad_out - fan_out)))

    w1 = w_init(ks[0], N_STATE, HIDDEN, N_STATE_PAD, HIDDEN_PAD)
    b1 = b_init(ks[1], N_STATE, HIDDEN, HIDDEN_PAD)
    w2 = w_init(ks[2], HIDDEN, HIDDEN, HIDDEN_PAD, HIDDEN_PAD)
    b2 = b_init(ks[3], HIDDEN, HIDDEN, HIDDEN_PAD)
    w3 = w_init(ks[4], HIDDEN, N_ACTION, HIDDEN_PAD, N_OUT_PAD)
    b3 = b_init(ks[5], HIDDEN, N_ACTION, N_OUT_PAD)
    return (w1, b1, w2, b2, w3, b3)


def network_forward_ref(x, params):
    """Plain-JAX reference with the same dtype policy as the kernel
    (bf16 matmul operands, f32 accumulation / bias / ReLU)."""
    w1, b1, w2, b2, w3, b3 = params
    xb = jnp.pad(x.astype(jnp.float32),
                 ((0, 0), (0, N_STATE_PAD - N_STATE))).astype(jnp.bfloat16)
    h1 = jnp.maximum(jnp.dot(xb, w1, preferred_element_type=jnp.float32) + b1, 0.0)
    h2 = jnp.maximum(jnp.dot(h1.astype(jnp.bfloat16), w2,
                             preferred_element_type=jnp.float32) + b2, 0.0)
    out = jnp.dot(h2.astype(jnp.bfloat16), w3,
                  preferred_element_type=jnp.float32) + b3
    return out[:, :N_ACTION]


if __name__ == "__main__":
    key = jax.random.PRNGKey(0)
    pkey, xkey = jax.random.split(key)
    params = init_params(pkey)

    batch = 4
    x = jax.random.normal(xkey, (batch, N_STATE), dtype=jnp.float32)

    out = jax.block_until_ready(network_forward(x, params))
    ref = jax.block_until_ready(network_forward_ref(x, params))

    assert out.shape == (batch, N_ACTION), out.shape
    assert jnp.allclose(out, ref, atol=5e-3, rtol=5e-3), "mismatch vs reference"

    print("KERNEL_OK")
</pallas_src>

<mosaic_0001>
module attributes {stable_mosaic.version = 11 : i64} {
  func.func @_mlp_kernel(%arg0: i32, %arg1: memref<8x384xf32, #tpu.memory_space<vmem>>, %arg2: memref<384x256xbf16, #tpu.memory_space<vmem>>, %arg3: memref<1x256xf32, #tpu.memory_space<vmem>>, %arg4: memref<256x256xbf16, #tpu.memory_space<vmem>>, %arg5: memref<1x256xf32, #tpu.memory_space<vmem>>, %arg6: memref<256x128xbf16, #tpu.memory_space<vmem>>, %arg7: memref<1x128xf32, #tpu.memory_space<vmem>>, %arg8: memref<8x128xf32, #tpu.memory_space<vmem>>) attributes {dimension_semantics = [#tpu.dimension_semantics<parallel>], iteration_bounds = array<i64: 1>, scalar_prefetch = 0 : i64, scratch_operands = 0 : i64, tpu.core_type = #tpu.core_type<tc>, window_params = [{transform_indices = @transform_0, window_bounds = array<i64: 8, 384>}, {pipeline_mode = #tpu.pipeline_mode<synchronous>, transform_indices = @transform_1, window_bounds = array<i64: 384, 256>}, {pipeline_mode = #tpu.pipeline_mode<synchronous>, transform_indices = @transform_2, window_bounds = array<i64: 1, 256>}, {pipeline_mode = #tpu.pipeline_mode<synchronous>, transform_indices = @transform_3, window_bounds = array<i64: 256, 256>}, {pipeline_mode = #tpu.pipeline_mode<synchronous>, transform_indices = @transform_4, window_bounds = array<i64: 1, 256>}, {pipeline_mode = #tpu.pipeline_mode<synchronous>, transform_indices = @transform_5, window_bounds = array<i64: 256, 128>}, {pipeline_mode = #tpu.pipeline_mode<synchronous>, transform_indices = @transform_6, window_bounds = array<i64: 1, 128>}, {transform_indices = @transform_7, window_bounds = array<i64: 8, 128>}]} {
    %c0 = arith.constant 0 : index
    %c0_0 = arith.constant 0 : index
    %0 = vector.load %arg1[%c0, %c0_0] : memref<8x384xf32, #tpu.memory_space<vmem>>, vector<8x384xf32>
    %1 = arith.truncf %0 : vector<8x384xf32> to vector<8x384xbf16>
    %c0_1 = arith.constant 0 : index
    %c0_2 = arith.constant 0 : index
    %2 = vector.load %arg2[%c0_1, %c0_2] : memref<384x256xbf16, #tpu.memory_space<vmem>>, vector<384x256xbf16>
    %cst = arith.constant dense<0.000000e+00> : vector<8x256xf32>
    %3 = tpu.matmul %1, %2, %cst {dimension_numbers = #tpu.dot_dimension_numbers<[1], [0], [0], [1], [0, 0, 1, 1], [], []>} : vector<8x384xbf16>, vector<384x256xbf16>, vector<8x256xf32> -> vector<8x256xf32>
    %c0_3 = arith.constant 0 : index
    %c0_4 = arith.constant 0 : index
    %4 = vector.load %arg3[%c0_3, %c0_4] : memref<1x256xf32, #tpu.memory_space<vmem>>, vector<1x256xf32>
    %5 = vector.broadcast %4 : vector<1x256xf32> to vector<8x256xf32>
    %6 = arith.addf %3, %5 : vector<8x256xf32>
    %cst_5 = arith.constant 0.000000e+00 : f32
    %7 = vector.broadcast %cst_5 : f32 to vector<8x256xf32>
    %8 = arith.maximumf %6, %7 : vector<8x256xf32>
    %9 = arith.truncf %8 : vector<8x256xf32> to vector<8x256xbf16>
    %c0_6 = arith.constant 0 : index
    %c0_7 = arith.constant 0 : index
    %10 = vector.load %arg4[%c0_6, %c0_7] : memref<256x256xbf16, #tpu.memory_space<vmem>>, vector<256x256xbf16>
    %cst_8 = arith.constant dense<0.000000e+00> : vector<8x256xf32>
    %11 = tpu.matmul %9, %10, %cst_8 {dimension_numbers = #tpu.dot_dimension_numbers<[1], [0], [0], [1], [0, 0, 1, 1], [], []>} : vector<8x256xbf16>, vector<256x256xbf16>, vector<8x256xf32> -> vector<8x256xf32>
    %c0_9 = arith.constant 0 : index
    %c0_10 = arith.constant 0 : index
    %12 = vector.load %arg5[%c0_9, %c0_10] : memref<1x256xf32, #tpu.memory_space<vmem>>, vector<1x256xf32>
    %13 = vector.broadcast %12 : vector<1x256xf32> to vector<8x256xf32>
    %14 = arith.addf %11, %13 : vector<8x256xf32>
    %cst_11 = arith.constant 0.000000e+00 : f32
    %15 = vector.broadcast %cst_11 : f32 to vector<8x256xf32>
    %16 = arith.maximumf %14, %15 : vector<8x256xf32>
    %17 = arith.truncf %16 : vector<8x256xf32> to vector<8x256xbf16>
    %c0_12 = arith.constant 0 : index
    %c0_13 = arith.constant 0 : index
    %18 = vector.load %arg6[%c0_12, %c0_13] : memref<256x128xbf16, #tpu.memory_space<vmem>>, vector<256x128xbf16>
    %cst_14 = arith.constant dense<0.000000e+00> : vector<8x128xf32>
    %19 = tpu.matmul %17, %18, %cst_14 {dimension_numbers = #tpu.dot_dimension_numbers<[1], [0], [0], [1], [0, 0, 1, 1], [], []>} : vector<8x256xbf16>, vector<256x128xbf16>, vector<8x128xf32> -> vector<8x128xf32>
    %c0_15 = arith.constant 0 : index
    %c0_16 = arith.constant 0 : index
    %20 = vector.load %arg7[%c0_15, %c0_16] : memref<1x128xf32, #tpu.memory_space<vmem>>, vector<1x128xf32>
    %21 = vector.broadcast %20 : vector<1x128xf32> to vector<8x128xf32>
    %22 = arith.addf %19, %21 : vector<8x128xf32>
    %c0_17 = arith.constant 0 : index
    %c0_18 = arith.constant 0 : index
    %23 = vector.load %arg8[%c0_17, %c0_18] : memref<8x128xf32, #tpu.memory_space<vmem>>, vector<8x128xf32>
    tpu.vector_store %arg8[%c0_17, %c0_18], %22 {strides = array<i32>} : memref<8x128xf32, #tpu.memory_space<vmem>>, vector<8x128xf32>,
    return
  }
  func.func @transform_0(%arg0: i32) -> (i32, i32) {
    %c0_i32 = arith.constant 0 : i32
    %c0_i32_0 = arith.constant 0 : i32
    return %arg0, %c0_i32 : i32, i32
  }
  func.func @transform_1(%arg0: i32) -> (i32, i32) {
    %c0_i32 = arith.constant 0 : i32
    %c0_i32_0 = arith.constant 0 : i32
    %c0_i32_1 = arith.constant 0 : i32
    return %c0_i32, %c0_i32_0 : i32, i32
  }
  func.func @transform_2(%arg0: i32) -> (i32, i32) {
    %c0_i32 = arith.constant 0 : i32
    %c0_i32_0 = arith.constant 0 : i32
    %c0_i32_1 = arith.constant 0 : i32
    return %c0_i32, %c0_i32_0 : i32, i32
  }
  func.func @transform_3(%arg0: i32) -> (i32, i32) {
    %c0_i32 = arith.constant 0 : i32
    %c0_i32_0 = arith.constant 0 : i32
    %c0_i32_1 = arith.constant 0 : i32
    return %c0_i32, %c0_i32_0 : i32, i32
  }
  func.func @transform_4(%arg0: i32) -> (i32, i32) {
    %c0_i32 = arith.constant 0 : i32
    %c0_i32_0 = arith.constant 0 : i32
    %c0_i32_1 = arith.constant 0 : i32
    return %c0_i32, %c0_i32_0 : i32, i32
  }
  func.func @transform_5(%arg0: i32) -> (i32, i32) {
    %c0_i32 = arith.constant 0 : i32
    %c0_i32_0 = arith.constant 0 : i32
    %c0_i32_1 = arith.constant 0 : i32
    return %c0_i32, %c0_i32_0 : i32, i32
  }
  func.func @transform_6(%arg0: i32) -> (i32, i32) {
    %c0_i32 = arith.constant 0 : i32
    %c0_i32_0 = arith.constant 0 : i32
    %c0_i32_1 = arith.constant 0 : i32
    return %c0_i32, %c0_i32_0 : i32, i32
  }
  func.func @transform_7(%arg0: i32) -> (i32, i32) {
    %c0_i32 = arith.constant 0 : i32
    %c0_i32_0 = arith.constant 0 : i32
    return %arg0, %c0_i32 : i32, i32
  }
}

</mosaic_0001>

<llo_original>
// kernel: tpu_custom_call.1
$region0: #{tpu_custom_call.1}
  #allocation0 [shape = 'u32[]', space=smem, size = 0x4, offset = 0x4, fixed_abs, tag = 'smem constant byte address 0x4 - core index']
  #allocation1 [shape = 'u32[144,128]{1,0:T(1,128)}', space=vmem, size = 0x12000, scoped, tag = 'internal scratch']
  %s0 = inlined_call_operand.hbm [shape: f32[8,384], index: 0, kind: input, shape index: {}]
  %s1 = inlined_call_operand.hbm [shape: bf16[384,256], index: 1, kind: input, shape index: {}]
  %s2 = inlined_call_operand.vmem [shape: f32[1,256], index: 2, kind: input, shape index: {}]
  %s3 = inlined_call_operand.hbm [shape: bf16[256,256], index: 3, kind: input, shape index: {}]
  %s4 = inlined_call_operand.vmem [shape: f32[1,256], index: 4, kind: input, shape index: {}]
  %s5 = inlined_call_operand.hbm [shape: bf16[256,128], index: 5, kind: input, shape index: {}]
  %s6 = inlined_call_operand.vmem [shape: f32[1,128], index: 6, kind: input, shape index: {}]
  %s7 = inlined_call_operand.hbm [shape: f32[8,128], index: 7, kind: output, shape index: {}]
  %s8 = sld [smem:[#allocation0]]
  $region54: #{tpu_custom_call.1} parent=0
    _
  %s10 = ssub.s32 1, %s8
  %s11 = scalar_select 0, %s10, %s8
  $region1: #{tpu_custom_call.1} parent=0
    #allocation2 [shape = 'u8[12288]{0}', space=vmem, size = 0x3000, scoped, tag = 'input window, operand 0, single buffered']
    #allocation3 [shape = 's32[1]{0}', space=sflag, size = 0x4, scoped, tag = 'scoped memory for tpu_custom_call.1']
    #allocation4 [shape = 's32[1]{0}', space=sflag, size = 0x4, scoped, tag = 'scoped memory for tpu_custom_call.1']
    #allocation5 [shape = 'u8[196608]{0}', space=vmem, size = 0x30000, scoped, tag = 'input window, operand 1, single buffered']
    #allocation6 [shape = 's32[1]{0}', space=sflag, size = 0x4, scoped, tag = 'scoped memory for tpu_custom_call.1']
    #allocation7 [shape = 'u8[131072]{0}', space=vmem, size = 0x20000, scoped, tag = 'input window, operand 3, single buffered']
    #allocation8 [shape = 'u8[65536]{0}', space=vmem, size = 0x10000, scoped, tag = 'input window, operand 5, single buffered']
    #allocation9 [shape = 's32[1]{0}', space=sflag, size = 0x4, scoped, tag = 'scoped memory for tpu_custom_call.1']
    #allocation10 [shape = 'u8[4096]{0}', space=vmem, size = 0x1000, scoped, tag = 'output window, operand 0, single buffered']
    %12 = vsyncpa [#allocation3], 0
    %13 = vsyncpa [#allocation6], 0
    %14 = vsyncpa [#allocation9], 0
    %15 = vsyncpa [#allocation4], 0
    // Predicated region
    $region2: #{tpu_custom_call.1} parent=1 // pred_check
      _
    $region3: #{tpu_custom_call.1} parent=1 // pred_check_branch
      %17 = sbr.rel (0) target = $region5
    $region4: #{tpu_custom_call.1} parent=1 // pred_region
      %s19 = ssub.s32 384, 384
      %20 = vsyncadd [#allocation3], %s19
      %s22 = sshll.u32 [#allocation2], 4
      %s23 = int_to_ptr.vmem [resolvable:$true] %s22
      %25 = dma.hbm_to_vmem [thread:$0]  %s0, 384, %s23, [#allocation3]
    $region5: #{tpu_custom_call.1} parent=1 // pred_fallthru
      _
    // Predicated region
    $region6: #{tpu_custom_call.1} parent=1 // pred_check
      _
    $region7: #{tpu_custom_call.1} parent=1 // pred_check_branch
      %27 = sbr.rel (0) target = $region9
    $region8: #{tpu_custom_call.1} parent=1 // pred_region
      %s29 = ssub.s32 6144, 6144
      %30 = vsyncadd [#allocation6], %s29
      %s31 = sshll.u32 [#allocation5], 4
      %s32 = int_to_ptr.vmem [resolvable:$true] %s31
      %37 = dma.hbm_to_vmem [thread:$0]  %s1, 6144, %s32, [#allocation6], 128, 128, 8
    $region9: #{tpu_custom_call.1} parent=1 // pred_fallthru
      _
    // Predicated region
    $region10: #{tpu_custom_call.1} parent=1 // pred_check
      _
    $region11: #{tpu_custom_call.1} parent=1 // pred_check_branch
      %39 = sbr.rel (0) target = $region13
    $region12: #{tpu_custom_call.1} parent=1 // pred_region
      _
    $region13: #{tpu_custom_call.1} parent=1 // pred_fallthru
      _
    // Predicated region
    $region14: #{tpu_custom_call.1} parent=1 // pred_check
      _
    $region15: #{tpu_custom_call.1} parent=1 // pred_check_branch
      %41 = sbr.rel (0) target = $region17
    $region16: #{tpu_custom_call.1} parent=1 // pred_region
      %s43 = ssub.s32 4096, 4096
      %44 = vsyncadd [#allocation6], %s43
      %s45 = sshll.u32 [#allocation7], 4
      %s46 = int_to_ptr.vmem [resolvable:$true] %s45
      %51 = dma.hbm_to_vmem [thread:$0]  %s3, 4096, %s46, [#allocation6], 128, 128, 8
    $region17: #{tpu_custom_call.1} parent=1 // pred_fallthru
      _
    // Predicated region
    $region18: #{tpu_custom_call.1} parent=1 // pred_check
      _
    $region19: #{tpu_custom_call.1} parent=1 // pred_check_branch
      %53 = sbr.rel (0) target = $region21
    $region20: #{tpu_custom_call.1} parent=1 // pred_region
      _
    $region21: #{tpu_custom_call.1} parent=1 // pred_fallthru
      _
    // Predicated region
    $region22: #{tpu_custom_call.1} parent=1 // pred_check
      _
    $region23: #{tpu_custom_call.1} parent=1 // pred_check_branch
      %55 = sbr.rel (0) target = $region25
    $region24: #{tpu_custom_call.1} parent=1 // pred_region
      %s57 = ssub.s32 2048, 2048
      %58 = vsyncadd [#allocation9], %s57
      %s59 = sshll.u32 [#allocation8], 4
      %s60 = int_to_ptr.vmem [resolvable:$true] %s59
      %65 = dma.hbm_to_vmem [thread:$0]  %s5, 2048, %s60, [#allocation9], 64, 64, 4
    $region25: #{tpu_custom_call.1} parent=1 // pred_fallthru
      _
    // Predicated region
    $region26: #{tpu_custom_call.1} parent=1 // pred_check
      _
    $region27: #{tpu_custom_call.1} parent=1 // pred_check_branch
      %67 = sbr.rel (0) target = $region29
    $region28: #{tpu_custom_call.1} parent=1 // pred_region
      _
    $region29: #{tpu_custom_call.1} parent=1 // pred_fallthru
      _
    // Predicated region
    $region30: #{tpu_custom_call.1} parent=1 // pred_check
      _
    $region31: #{tpu_custom_call.1} parent=1 // pred_check_branch
      %69 = sbr.rel (0) target = $region33
    $region32: #{tpu_custom_call.1} parent=1 // pred_region
      %70 = dma.done [#allocation3], 384
    $region33: #{tpu_custom_call.1} parent=1 // pred_fallthru
      _
    // Predicated region
    $region34: #{tpu_custom_call.1} parent=1 // pred_check
      _
    $region35: #{tpu_custom_call.1} parent=1 // pred_check_branch
      %72 = sbr.rel (0) target = $region37
    $region36: #{tpu_custom_call.1} parent=1 // pred_region
      %73 = dma.done [#allocation6], 6144
    $region37: #{tpu_custom_call.1} parent=1 // pred_fallthru
      _
    // Predicated region
    $region38: #{tpu_custom_call.1} parent=1 // pred_check
      _
    $region39: #{tpu_custom_call.1} parent=1 // pred_check_branch
      %75 = sbr.rel (0) target = $region41
    $region40: #{tpu_custom_call.1} parent=1 // pred_region
      %76 = dma.done [#allocation6], 4096
    $region41: #{tpu_custom_call.1} parent=1 // pred_fallthru
      _
    // Predicated region
    $region42: #{tpu_custom_call.1} parent=1 // pred_check
      _
    $region43: #{tpu_custom_call.1} parent=1 // pred_check_branch
      %78 = sbr.rel (0) target = $region45
    $region44: #{tpu_custom_call.1} parent=1 // pred_region
      %79 = dma.done [#allocation9], 2048
    $region45: #{tpu_custom_call.1} parent=1 // pred_fallthru
      _
    %v81 = vld [vmem:[#allocation2] sm:$0xff]
    %v82 = vld [vmem:[#allocation2 + $0x8] sm:$0xff]
    %v83 = vld [vmem:[#allocation2 + $0x10] sm:$0xff]
    %v84 = vpack.c.bf16 %v81, %v81
    %v85 = vpack.c.bf16 %v82, %v82
    %v86 = vpack.c.bf16 %v83, %v83
    %v87 = vld [vmem:[#allocation5] sm:$0xff]
    %v88 = vld [vmem:[#allocation5 + $0x8] sm:$0xff]
    %v89 = vld [vmem:[#allocation5 + $0x10] sm:$0xff]
    %v90 = vld [vmem:[#allocation5 + $0x18] sm:$0xff]
    %v91 = vld [vmem:[#allocation5 + $0x20] sm:$0xff]
    %v92 = vld [vmem:[#allocation5 + $0x28] sm:$0xff]
    %v93 = vld [vmem:[#allocation5 + $0x30] sm:$0xff]
    %v94 = vld [vmem:[#allocation5 + $0x38] sm:$0xff]
    %v95 = vld [vmem:[#allocation5 + $0x40] sm:$0xff]
    %v96 = vld [vmem:[#allocation5 + $0x48] sm:$0xff]
    %v97 = vld [vmem:[#allocation5 + $0x50] sm:$0xff]
    %v98 = vld [vmem:[#allocation5 + $0x58] sm:$0xff]
    %v99 = vld [vmem:[#allocation5 + $0x60] sm:$0xff]
    %v100 = vld [vmem:[#allocation5 + $0x68] sm:$0xff]
    %v101 = vld [vmem:[#allocation5 + $0x70] sm:$0xff]
    %v102 = vld [vmem:[#allocation5 + $0x78] sm:$0xff]
    %v103 = vld [vmem:[#allocation5 + $0x80] sm:$0xff]
    %v104 = vld [vmem:[#allocation5 + $0x88] sm:$0xff]
    %v105 = vld [vmem:[#allocation5 + $0x90] sm:$0xff]
    %v106 = vld [vmem:[#allocation5 + $0x98] sm:$0xff]
    %v107 = vld [vmem:[#allocation5 + $0xa0] sm:$0xff]
    %v108 = vld [vmem:[#allocation5 + $0xa8] sm:$0xff]
    %v109 = vld [vmem:[#allocation5 + $0xb0] sm:$0xff]
    %v110 = vld [vmem:[#allocation5 + $0xb8] sm:$0xff]
    %v111 = vld [vmem:[#allocation5 + $0xc0] sm:$0xff]
    %v112 = vld [vmem:[#allocation5 + $0xc8] sm:$0xff]
    %v113 = vld [vmem:[#allocation5 + $0xd0] sm:$0xff]
    %v114 = vld [vmem:[#allocation5 + $0xd8] sm:$0xff]
    %v115 = vld [vmem:[#allocation5 + $0xe0] sm:$0xff]
    %v116 = vld [vmem:[#allocation5 + $0xe8] sm:$0xff]
    %v117 = vld [vmem:[#allocation5 + $0xf0] sm:$0xff]
    %v118 = vld [vmem:[#allocation5 + $0xf8] sm:$0xff]
    %v119 = vld [vmem:[#allocation5 + $0x100] sm:$0xff]
    %v120 = vld [vmem:[#allocation5 + $0x108] sm:$0xff]
    %v121 = vld [vmem:[#allocation5 + $0x110] sm:$0xff]
    %v122 = vld [vmem:[#allocation5 + $0x118] sm:$0xff]
    %v123 = vld [vmem:[#allocation5 + $0x120] sm:$0xff]
    %v124 = vld [vmem:[#allocation5 + $0x128] sm:$0xff]
    %v125 = vld [vmem:[#allocation5 + $0x130] sm:$0xff]
    %v126 = vld [vmem:[#allocation5 + $0x138] sm:$0xff]
    %v127 = vld [vmem:[#allocation5 + $0x140] sm:$0xff]
    %v128 = vld [vmem:[#allocation5 + $0x148] sm:$0xff]
    %v129 = vld [vmem:[#allocation5 + $0x150] sm:$0xff]
    %v130 = vld [vmem:[#allocation5 + $0x158] sm:$0xff]
    %v131 = vld [vmem:[#allocation5 + $0x160] sm:$0xff]
    %v132 = vld [vmem:[#allocation5 + $0x168] sm:$0xff]
    %v133 = vld [vmem:[#allocation5 + $0x170] sm:$0xff]
    %v134 = vld [vmem:[#allocation5 + $0x178] sm:$0xff]
    %v135 = vld [vmem:[%s2] sm:$0x3]
    %v137 = vlaneseq
    %v138 = vshrl.u32 %v137, 7
    %v139 = vsub.s32 0, %v138
    %v140 = vrot.slane %v135, %v139
    %v141 = vlaneseq
    %v142 = vshrl.u32 %v141, 7
    %v143 = vsub.s32 1, %v142
    %v144 = vrot.slane %v135, %v143
    %v195 = vunpack.c.l.b16 %v87
    %v196 = vunpack.c.h.b16 %v87
    %v197 = vunpack.c.l.b16 %v88
    %v198 = vunpack.c.h.b16 %v88
    %v199 = vunpack.c.l.b16 %v89
    %v200 = vunpack.c.h.b16 %v89
    %v201 = vunpack.c.l.b16 %v90
    %v202 = vunpack.c.h.b16 %v90
    %v203 = vunpack.c.l.b16 %v91
    %v204 = vunpack.c.h.b16 %v91
    %v205 = vunpack.c.l.b16 %v92
    %v206 = vunpack.c.h.b16 %v92
    %v207 = vunpack.c.l.b16 %v93
    %v208 = vunpack.c.h.b16 %v93
    %v209 = vunpack.c.l.b16 %v94
    %v210 = vunpack.c.h.b16 %v94
    %v211 = vunpack.c.l.b16 %v95
    %v212 = vunpack.c.h.b16 %v95
    %v213 = vunpack.c.l.b16 %v96
    %v214 = vunpack.c.h.b16 %v96
    %v215 = vunpack.c.l.b16 %v97
    %v216 = vunpack.c.h.b16 %v97
    %v217 = vunpack.c.l.b16 %v98
    %v218 = vunpack.c.h.b16 %v98
    %v219 = vunpack.c.l.b16 %v99
    %v220 = vunpack.c.h.b16 %v99
    %v221 = vunpack.c.l.b16 %v100
    %v222 = vunpack.c.h.b16 %v100
    %v223 = vunpack.c.l.b16 %v101
    %v224 = vunpack.c.h.b16 %v101
    %v225 = vunpack.c.l.b16 %v102
    %v226 = vunpack.c.h.b16 %v102
    %v227 = vunpack.c.l.b16 %v103
    %v228 = vunpack.c.h.b16 %v103
    %v229 = vunpack.c.l.b16 %v104
    %v230 = vunpack.c.h.b16 %v104
    %v231 = vunpack.c.l.b16 %v105
    %v232 = vunpack.c.h.b16 %v105
    %v233 = vunpack.c.l.b16 %v106
    %v234 = vunpack.c.h.b16 %v106
    %v235 = vunpack.c.l.b16 %v107
    %v236 = vunpack.c.h.b16 %v107
    %v237 = vunpack.c.l.b16 %v108
    %v238 = vunpack.c.h.b16 %v108
    %v239 = vunpack.c.l.b16 %v109
    %v240 = vunpack.c.h.b16 %v109
    %v241 = vunpack.c.l.b16 %v110
    %v242 = vunpack.c.h.b16 %v110
    %v243 = vunpack.c.l.b16 %v111
    %v244 = vunpack.c.h.b16 %v111
    %v245 = vunpack.c.l.b16 %v112
    %v246 = vunpack.c.h.b16 %v112
    %v247 = vunpack.c.l.b16 %v113
    %v248 = vunpack.c.h.b16 %v113
    %v249 = vunpack.c.l.b16 %v114
    %v250 = vunpack.c.h.b16 %v114
    %v251 = vunpack.c.l.b16 %v115
    %v252 = vunpack.c.h.b16 %v115
    %v253 = vunpack.c.l.b16 %v116
    %v254 = vunpack.c.h.b16 %v116
    %v255 = vunpack.c.l.b16 %v117
    %v256 = vunpack.c.h.b16 %v117
    %v257 = vunpack.c.l.b16 %v118
    %v258 = vunpack.c.h.b16 %v118
    %v259 = vunpack.c.l.b16 %v119
    %v260 = vunpack.c.h.b16 %v119
    %v261 = vunpack.c.l.b16 %v120
    %v262 = vunpack.c.h.b16 %v120
    %v263 = vunpack.c.l.b16 %v121
    %v264 = vunpack.c.h.b16 %v121
    %v265 = vunpack.c.l.b16 %v122
    %v266 = vunpack.c.h.b16 %v122
    %v267 = vunpack.c.l.b16 %v123
    %v268 = vunpack.c.h.b16 %v123
    %v269 = vunpack.c.l.b16 %v124
    %v270 = vunpack.c.h.b16 %v124
    %v271 = vunpack.c.l.b16 %v125
    %v272 = vunpack.c.h.b16 %v125
    %v273 = vunpack.c.l.b16 %v126
    %v274 = vunpack.c.h.b16 %v126
    %v275 = vunpack.c.l.b16 %v127
    %v276 = vunpack.c.h.b16 %v127
    %v277 = vunpack.c.l.b16 %v128
    %v278 = vunpack.c.h.b16 %v128
    %v279 = vunpack.c.l.b16 %v129
    %v280 = vunpack.c.h.b16 %v129
    %v281 = vunpack.c.l.b16 %v130
    %v282 = vunpack.c.h.b16 %v130
    %v283 = vunpack.c.l.b16 %v131
    %v284 = vunpack.c.h.b16 %v131
    %v285 = vunpack.c.l.b16 %v132
    %v286 = vunpack.c.h.b16 %v132
    %v287 = vunpack.c.l.b16 %v133
    %v288 = vunpack.c.h.b16 %v133
    %v289 = vunpack.c.l.b16 %v134
    %v290 = vunpack.c.h.b16 %v134
    %v291 = vpack.c.b16 %v197, %v195
    %v292 = vpack.c.b16 %v198, %v196
    %v293 = vpack.c.b16 %v201, %v199
    %v294 = vpack.c.b16 %v202, %v200
    %v295 = vpack.c.b16 %v205, %v203
    %v296 = vpack.c.b16 %v206, %v204
    %v297 = vpack.c.b16 %v209, %v207
    %v298 = vpack.c.b16 %v210, %v208
    %v299 = vpack.c.b16 %v213, %v211
    %v300 = vpack.c.b16 %v214, %v212
    %v301 = vpack.c.b16 %v217, %v215
    %v302 = vpack.c.b16 %v218, %v216
    %v303 = vpack.c.b16 %v221, %v219
    %v304 = vpack.c.b16 %v222, %v220
    %v305 = vpack.c.b16 %v225, %v223
    %v306 = vpack.c.b16 %v226, %v224
    %v307 = vpack.c.b16 %v229, %v227
    %v308 = vpack.c.b16 %v230, %v228
    %v309 = vpack.c.b16 %v233, %v231
    %v310 = vpack.c.b16 %v234, %v232
    %v311 = vpack.c.b16 %v237, %v235
    %v312 = vpack.c.b16 %v238, %v236
    %v313 = vpack.c.b16 %v241, %v239
    %v314 = vpack.c.b16 %v242, %v240
    %v315 = vpack.c.b16 %v245, %v243
    %v316 = vpack.c.b16 %v246, %v244
    %v317 = vpack.c.b16 %v249, %v247
    %v318 = vpack.c.b16 %v250, %v248
    %v319 = vpack.c.b16 %v253, %v251
    %v320 = vpack.c.b16 %v254, %v252
    %v321 = vpack.c.b16 %v257, %v255
    %v322 = vpack.c.b16 %v258, %v256
    %v323 = vpack.c.b16 %v261, %v259
    %v324 = vpack.c.b16 %v262, %v260
    %v325 = vpack.c.b16 %v265, %v263
    %v326 = vpack.c.b16 %v266, %v264
    %v327 = vpack.c.b16 %v269, %v267
    %v328 = vpack.c.b16 %v270, %v268
    %v329 = vpack.c.b16 %v273, %v271
    %v330 = vpack.c.b16 %v274, %v272
    %v331 = vpack.c.b16 %v277, %v275
    %v332 = vpack.c.b16 %v278, %v276
    %v333 = vpack.c.b16 %v281, %v279
    %v334 = vpack.c.b16 %v282, %v280
    %v335 = vpack.c.b16 %v285, %v283
    %v336 = vpack.c.b16 %v286, %v284
    %v337 = vpack.c.b16 %v289, %v287
    %v338 = vpack.c.b16 %v290, %v288
    %387 = vmatprep.subr.bf16.mxu0 %v292
    %388 = vmatpush1.bf16.msra.mxu0 %v291
    %389 = vmatprep.subr.bf16.mxu0 %v294
    %390 = vmatpush1.bf16.msra.mxu0 %v293
    %391 = vmatprep.subr.bf16.mxu0 %v296
    %392 = vmatpush1.bf16.msra.mxu0 %v295
    %393 = vmatprep.subr.bf16.mxu0 %v298
    %394 = vmatpush1.bf16.msra.mxu0 %v297
    %395 = vmatprep.subr.bf16.mxu0 %v300
    %396 = vmatpush1.bf16.msra.mxu0 %v299
    %397 = vmatprep.subr.bf16.mxu0 %v302
    %398 = vmatpush1.bf16.msra.mxu0 %v301
    %399 = vmatprep.subr.bf16.mxu0 %v304
    %400 = vmatpush1.bf16.msra.mxu0 %v303
    %401 = vmatprep.subr.bf16.mxu0 %v306
    %402 = vmatpush1.bf16.msra.mxu0 %v305
    %403 = vmatprep.subr.bf16.mxu0 %v308
    %404 = vmatpush1.bf16.msra.mxu0 %v307
    %405 = vmatprep.subr.bf16.mxu0 %v310
    %406 = vmatpush1.bf16.msra.mxu0 %v309
    %407 = vmatprep.subr.bf16.mxu0 %v312
    %408 = vmatpush1.bf16.msra.mxu0 %v311
    %409 = vmatprep.subr.bf16.mxu0 %v314
    %410 = vmatpush1.bf16.msra.mxu0 %v313
    %411 = vmatprep.subr.bf16.mxu0 %v316
    %412 = vmatpush1.bf16.msra.mxu0 %v315
    %413 = vmatprep.subr.bf16.mxu0 %v318
    %414 = vmatpush1.bf16.msra.mxu0 %v317
    %415 = vmatprep.subr.bf16.mxu0 %v320
    %416 = vmatpush1.bf16.msra.mxu0 %v319
    %417 = vmatprep.subr.bf16.mxu0 %v322
    %418 = vmatpush1.bf16.msra.mxu0 %v321
    %419 = vmatprep.mubr.bf16.mxu0 %v85
    %420 = vmatmul.mubr.bf16.gmra.mrb[0].mxu0 %v84
    %v421 = vpop.f32.mrb[0].mxu0
    %v422 = vadd.f32 %v140, %v421
    %v423 = vpop.f32.mrb[0].mxu0
    %v424 = vadd.f32 %v144, %v423
    %v425 = vpop.f32.mrb[0].mxu0
    %v426 = vpop.f32.mrb[0].mxu0
    %427 = vdwg.mxu0
    %428 = vmatprep.subr.bf16.mxu0 %v324
    %429 = vmatpush1.bf16.msra.mxu0 %v323
    %430 = vmatprep.subr.bf16.mxu0 %v326
    %431 = vmatpush1.bf16.msra.mxu0 %v325
    %432 = vmatprep.subr.bf16.mxu0 %v328
    %433 = vmatpush1.bf16.msra.mxu0 %v327
    %434 = vmatprep.subr.bf16.mxu0 %v330
    %435 = vmatpush1.bf16.msra.mxu0 %v329
    %436 = vmatprep.subr.bf16.mxu0 %v332
    %437 = vmatpush1.bf16.msra.mxu0 %v331
    %438 = vmatprep.subr.bf16.mxu0 %v334
    %439 = vmatpush1.bf16.msra.mxu0 %v333
    %440 = vmatprep.subr.bf16.mxu0 %v336
    %441 = vmatpush1.bf16.msra.mxu0 %v335
    %442 = vmatprep.subr.bf16.mxu0 %v338
    %443 = vmatpush1.bf16.msra.mxu0 %v337
    %444 = vmatprep.subr.bf16.mxu0 0
    %445 = vmatpush1.bf16.msra.mxu0 0
    %446 = vmatprep.subr.bf16.mxu0 0
    %447 = vmatpush1.bf16.msra.mxu0 0
    %448 = vmatprep.subr.bf16.mxu0 0
    %449 = vmatpush1.bf16.msra.mxu0 0
    %450 = vmatprep.subr.bf16.mxu0 0
    %451 = vmatpush1.bf16.msra.mxu0 0
    %452 = vmatprep.subr.bf16.mxu0 0
    %453 = vmatpush1.bf16.msra.mxu0 0
    %454 = vmatprep.subr.bf16.mxu0 0
    %455 = vmatpush1.bf16.msra.mxu0 0
    %456 = vmatprep.subr.bf16.mxu0 0
    %457 = vmatpush1.bf16.msra.mxu0 0
    %458 = vmatprep.subr.bf16.mxu0 0
    %459 = vmatpush1.bf16.msra.mxu0 0
    %460 = vmatprep.mubr.bf16.mxu0 0
    %461 = vmatmul.mubr.bf16.gmra.mrb[0].mxu0 %v86
    %v462 = vpop.f32.mrb[0].mxu0
    %v463 = vadd.f32 %v422, %v462
    %v464 = vpop.f32.mrb[0].mxu0
    %v465 = vadd.f32 %v424, %v464
    %v466 = vpop.f32.mrb[0].mxu0
    %v467 = vpop.f32.mrb[0].mxu0
    %468 = vdwg.mxu0
    %v469 = vmax.f32 %v463, 0.0
    %v470 = vmax.f32 %v465, 0.0
    %v471 = vpack.c.bf16 %v469, %v469
    %v472 = vpack.c.bf16 %v470, %v470
    %v473 = vld [vmem:[#allocation7] sm:$0xff]
    %v474 = vld [vmem:[#allocation7 + $0x8] sm:$0xff]
    %v475 = vld [vmem:[#allocation7 + $0x10] sm:$0xff]
    %v476 = vld [vmem:[#allocation7 + $0x18] sm:$0xff]
    %v477 = vld [vmem:[#allocation7 + $0x20] sm:$0xff]
    %v478 = vld [vmem:[#allocation7 + $0x28] sm:$0xff]
    %v479 = vld [vmem:[#allocation7 + $0x30] sm:$0xff]
    %v480 = vld [vmem:[#allocation7 + $0x38] sm:$0xff]
    %v481 = vld [vmem:[#allocation7 + $0x40] sm:$0xff]
    %v482 = vld [vmem:[#allocation7 + $0x48] sm:$0xff]
    %v483 = vld [vmem:[#allocation7 + $0x50] sm:$0xff]
    %v484 = vld [vmem:[#allocation7 + $0x58] sm:$0xff]
    %v485 = vld [vmem:[#allocation7 + $0x60] sm:$0xff]
    %v486 = vld [vmem:[#allocation7 + $0x68] sm:$0xff]
    %v487 = vld [vmem:[#allocation7 + $0x70] sm:$0xff]
    %v488 = vld [vmem:[#allocation7 + $0x78] sm:$0xff]
    %v489 = vld [vmem:[#allocation7 + $0x80] sm:$0xff]
    %v490 = vld [vmem:[#allocation7 + $0x88] sm:$0xff]
    %v491 = vld [vmem:[#allocation7 + $0x90] sm:$0xff]
    %v492 = vld [vmem:[#allocation7 + $0x98] sm:$0xff]
    %v493 = vld [vmem:[#allocation7 + $0xa0] sm:$0xff]
    %v494 = vld [vmem:[#allocation7 + $0xa8] sm:$0xff]
    %v495 = vld [vmem:[#allocation7 + $0xb0] sm:$0xff]
    %v496 = vld [vmem:[#allocation7 + $0xb8] sm:$0xff]
    %v497 = vld [vmem:[#allocation7 + $0xc0] sm:$0xff]
    %v498 = vld [vmem:[#allocation7 + $0xc8] sm:$0xff]
    %v499 = vld [vmem:[#allocation7 + $0xd0] sm:$0xff]
    %v500 = vld [vmem:[#allocation7 + $0xd8] sm:$0xff]
    %v501 = vld [vmem:[#allocation7 + $0xe0] sm:$0xff]
    %v502 = vld [vmem:[#allocation7 + $0xe8] sm:$0xff]
    %v503 = vld [vmem:[#allocation7 + $0xf0] sm:$0xff]
    %v504 = vld [vmem:[#allocation7 + $0xf8] sm:$0xff]
    %v505 = vld [vmem:[%s4] sm:$0x3]
    %v507 = vlaneseq
    %v508 = vshrl.u32 %v507, 7
    %v509 = vsub.s32 0, %v508
    %v510 = vrot.slane %v505, %v509
    %v511 = vlaneseq
    %v512 = vshrl.u32 %v511, 7
    %v513 = vsub.s32 1, %v512
    %v514 = vrot.slane %v505, %v513
    %v549 = vunpack.c.l.b16 %v473
    %v550 = vunpack.c.h.b16 %v473
    %v551 = vunpack.c.l.b16 %v474
    %v552 = vunpack.c.h.b16 %v474
    %v553 = vunpack.c.l.b16 %v475
    %v554 = vunpack.c.h.b16 %v475
    %v555 = vunpack.c.l.b16 %v476
    %v556 = vunpack.c.h.b16 %v476
    %v557 = vunpack.c.l.b16 %v477
    %v558 = vunpack.c.h.b16 %v477
    %v559 = vunpack.c.l.b16 %v478
    %v560 = vunpack.c.h.b16 %v478
    %v561 = vunpack.c.l.b16 %v479
    %v562 = vunpack.c.h.b16 %v479
    %v563 = vunpack.c.l.b16 %v480
    %v564 = vunpack.c.h.b16 %v480
    %v565 = vunpack.c.l.b16 %v481
    %v566 = vunpack.c.h.b16 %v481
    %v567 = vunpack.c.l.b16 %v482
    %v568 = vunpack.c.h.b16 %v482
    %v569 = vunpack.c.l.b16 %v483
    %v570 = vunpack.c.h.b16 %v483
    %v571 = vunpack.c.l.b16 %v484
    %v572 = vunpack.c.h.b16 %v484
    %v573 = vunpack.c.l.b16 %v485
    %v574 = vunpack.c.h.b16 %v485
    %v575 = vunpack.c.l.b16 %v486
    %v576 = vunpack.c.h.b16 %v486
    %v577 = vunpack.c.l.b16 %v487
    %v578 = vunpack.c.h.b16 %v487
    %v579 = vunpack.c.l.b16 %v488
    %v580 = vunpack.c.h.b16 %v488
    %v581 = vunpack.c.l.b16 %v489
    %v582 = vunpack.c.h.b16 %v489
    %v583 = vunpack.c.l.b16 %v490
    %v584 = vunpack.c.h.b16 %v490
    %v585 = vunpack.c.l.b16 %v491
    %v586 = vunpack.c.h.b16 %v491
    %v587 = vunpack.c.l.b16 %v492
    %v588 = vunpack.c.h.b16 %v492
    %v589 = vunpack.c.l.b16 %v493
    %v590 = vunpack.c.h.b16 %v493
    %v591 = vunpack.c.l.b16 %v494
    %v592 = vunpack.c.h.b16 %v494
    %v593 = vunpack.c.l.b16 %v495
    %v594 = vunpack.c.h.b16 %v495
    %v595 = vunpack.c.l.b16 %v496
    %v596 = vunpack.c.h.b16 %v496
    %v597 = vunpack.c.l.b16 %v497
    %v598 = vunpack.c.h.b16 %v497
    %v599 = vunpack.c.l.b16 %v498
    %v600 = vunpack.c.h.b16 %v498
    %v601 = vunpack.c.l.b16 %v499
    %v602 = vunpack.c.h.b16 %v499
    %v603 = vunpack.c.l.b16 %v500
    %v604 = vunpack.c.h.b16 %v500
    %v605 = vunpack.c.l.b16 %v501
    %v606 = vunpack.c.h.b16 %v501
    %v607 = vunpack.c.l.b16 %v502
    %v608 = vunpack.c.h.b16 %v502
    %v609 = vunpack.c.l.b16 %v503
    %v610 = vunpack.c.h.b16 %v503
    %v611 = vunpack.c.l.b16 %v504
    %v612 = vunpack.c.h.b16 %v504
    %v613 = vpack.c.b16 %v551, %v549
    %v614 = vpack.c.b16 %v552, %v550
    %v615 = vpack.c.b16 %v555, %v553
    %v616 = vpack.c.b16 %v556, %v554
    %v617 = vpack.c.b16 %v559, %v557
    %v618 = vpack.c.b16 %v560, %v558
    %v619 = vpack.c.b16 %v563, %v561
    %v620 = vpack.c.b16 %v564, %v562
    %v621 = vpack.c.b16 %v567, %v565
    %v622 = vpack.c.b16 %v568, %v566
    %v623 = vpack.c.b16 %v571, %v569
    %v624 = vpack.c.b16 %v572, %v570
    %v625 = vpack.c.b16 %v575, %v573
    %v626 = vpack.c.b16 %v576, %v574
    %v627 = vpack.c.b16 %v579, %v577
    %v628 = vpack.c.b16 %v580, %v578
    %v629 = vpack.c.b16 %v583, %v581
    %v630 = vpack.c.b16 %v584, %v582
    %v631 = vpack.c.b16 %v587, %v585
    %v632 = vpack.c.b16 %v588, %v586
    %v633 = vpack.c.b16 %v591, %v589
    %v634 = vpack.c.b16 %v592, %v590
    %v635 = vpack.c.b16 %v595, %v593
    %v636 = vpack.c.b16 %v596, %v594
    %v637 = vpack.c.b16 %v599, %v597
    %v638 = vpack.c.b16 %v600, %v598
    %v639 = vpack.c.b16 %v603, %v601
    %v640 = vpack.c.b16 %v604, %v602
    %v641 = vpack.c.b16 %v607, %v605
    %v642 = vpack.c.b16 %v608, %v606
    %v643 = vpack.c.b16 %v611, %v609
    %v644 = vpack.c.b16 %v612, %v610
    %677 = vmatprep.subr.bf16.mxu0 %v614
    %678 = vmatpush1.bf16.msra.mxu0 %v613
    %679 = vmatprep.subr.bf16.mxu0 %v616
    %680 = vmatpush1.bf16.msra.mxu0 %v615
    %681 = vmatprep.subr.bf16.mxu0 %v618
    %682 = vmatpush1.bf16.msra.mxu0 %v617
    %683 = vmatprep.subr.bf16.mxu0 %v620
    %684 = vmatpush1.bf16.msra.mxu0 %v619
    %685 = vmatprep.subr.bf16.mxu0 %v622
    %686 = vmatpush1.bf16.msra.mxu0 %v621
    %687 = vmatprep.subr.bf16.mxu0 %v624
    %688 = vmatpush1.bf16.msra.mxu0 %v623
    %689 = vmatprep.subr.bf16.mxu0 %v626
    %690 = vmatpush1.bf16.msra.mxu0 %v625
    %691 = vmatprep.subr.bf16.mxu0 %v628
    %692 = vmatpush1.bf16.msra.mxu0 %v627
    %693 = vmatprep.subr.bf16.mxu0 %v630
    %694 = vmatpush1.bf16.msra.mxu0 %v629
    %695 = vmatprep.subr.bf16.mxu0 %v632
    %696 = vmatpush1.bf16.msra.mxu0 %v631
    %697 = vmatprep.subr.bf16.mxu0 %v634
    %698 = vmatpush1.bf16.msra.mxu0 %v633
    %699 = vmatprep.subr.bf16.mxu0 %v636
    %700 = vmatpush1.bf16.msra.mxu0 %v635
    %701 = vmatprep.subr.bf16.mxu0 %v638
    %702 = vmatpush1.bf16.msra.mxu0 %v637
    %703 = vmatprep.subr.bf16.mxu0 %v640
    %704 = vmatpush1.bf16.msra.mxu0 %v639
    %705 = vmatprep.subr.bf16.mxu0 %v642
    %706 = vmatpush1.bf16.msra.mxu0 %v641
    %707 = vmatprep.subr.bf16.mxu0 %v644
    %708 = vmatpush1.bf16.msra.mxu0 %v643
    %709 = vmatprep.mubr.bf16.mxu0 %v472
    %710 = vmatmul.mubr.bf16.gmra.mrb[0].mxu0 %v471
    %v711 = vpop.f32.mrb[0].mxu0
    %v712 = vadd.f32 %v510, %v711
    %v713 = vpop.f32.mrb[0].mxu0
    %v714 = vadd.f32 %v514, %v713
    %v715 = vpop.f32.mrb[0].mxu0
    %v716 = vpop.f32.mrb[0].mxu0
    %717 = vdwg.mxu0
    %v718 = vmax.f32 %v712, 0.0
    %v719 = vmax.f32 %v714, 0.0
    %v720 = vpack.c.bf16 %v718, %v718
    %v721 = vpack.c.bf16 %v719, %v719
    %v722 = vld [vmem:[#allocation8] sm:$0xf]
    %v723 = vld [vmem:[#allocation8 + $0x4] sm:$0xf]
    %v724 = vld [vmem:[#allocation8 + $0x8] sm:$0xf]
    %v725 = vld [vmem:[#allocation8 + $0xc] sm:$0xf]
    %v726 = vld [vmem:[#allocation8 + $0x10] sm:$0xf]
    %v727 = vld [vmem:[#allocation8 + $0x14] sm:$0xf]
    %v728 = vld [vmem:[#allocation8 + $0x18] sm:$0xf]
    %v729 = vld [vmem:[#allocation8 + $0x1c] sm:$0xf]
    %v730 = vld [vmem:[#allocation8 + $0x20] sm:$0xf]
    %v731 = vld [vmem:[#allocation8 + $0x24] sm:$0xf]
    %v732 = vld [vmem:[#allocation8 + $0x28] sm:$0xf]
    %v733 = vld [vmem:[#allocation8 + $0x2c] sm:$0xf]
    %v734 = vld [vmem:[#allocation8 + $0x30] sm:$0xf]
    %v735 = vld [vmem:[#allocation8 + $0x34] sm:$0xf]
    %v736 = vld [vmem:[#allocation8 + $0x38] sm:$0xf]
    %v737 = vld [vmem:[#allocation8 + $0x3c] sm:$0xf]
    %v738 = vld [vmem:[#allocation8 + $0x40] sm:$0xf]
    %v739 = vld [vmem:[#allocation8 + $0x44] sm:$0xf]
    %v740 = vld [vmem:[#allocation8 + $0x48] sm:$0xf]
    %v741 = vld [vmem:[#allocation8 + $0x4c] sm:$0xf]
    %v742 = vld [vmem:[#allocation8 + $0x50] sm:$0xf]
    %v743 = vld [vmem:[#allocation8 + $0x54] sm:$0xf]
    %v744 = vld [vmem:[#allocation8 + $0x58] sm:$0xf]
    %v745 = vld [vmem:[#allocation8 + $0x5c] sm:$0xf]
    %v746 = vld [vmem:[#allocation8 + $0x60] sm:$0xf]
    %v747 = vld [vmem:[#allocation8 + $0x64] sm:$0xf]
    %v748 = vld [vmem:[#allocation8 + $0x68] sm:$0xf]
    %v749 = vld [vmem:[#allocation8 + $0x6c] sm:$0xf]
    %v750 = vld [vmem:[#allocation8 + $0x70] sm:$0xf]
    %v751 = vld [vmem:[#allocation8 + $0x74] sm:$0xf]
    %v752 = vld [vmem:[#allocation8 + $0x78] sm:$0xf]
    %v753 = vld [vmem:[#allocation8 + $0x7c] sm:$0xf]
    %v754 = vld [vmem:[%s6] sm:$0x1]
    %v756 = vlaneseq
    %v757 = vshrl.u32 %v756, 7
    %v758 = vsub.s32 0, %v757
    %v759 = vrot.slane %v754, %v758
    %v793 = vunpack.c.l.b16 %v722
    %v794 = vunpack.c.l.b16 %v723
    %v795 = vunpack.c.l.b16 %v724
    %v796 = vunpack.c.l.b16 %v725
    %v797 = vunpack.c.l.b16 %v726
    %v798 = vunpack.c.l.b16 %v727
    %v799 = vunpack.c.l.b16 %v728
    %v800 = vunpack.c.l.b16 %v729
    %v801 = vunpack.c.l.b16 %v730
    %v802 = vunpack.c.l.b16 %v731
    %v803 = vunpack.c.l.b16 %v732
    %v804 = vunpack.c.l.b16 %v733
    %v805 = vunpack.c.l.b16 %v734
    %v806 = vunpack.c.l.b16 %v735
    %v807 = vunpack.c.l.b16 %v736
    %v808 = vunpack.c.l.b16 %v737
    %v809 = vunpack.c.l.b16 %v738
    %v810 = vunpack.c.l.b16 %v739
    %v811 = vunpack.c.l.b16 %v740
    %v812 = vunpack.c.l.b16 %v741
    %v813 = vunpack.c.l.b16 %v742
    %v814 = vunpack.c.l.b16 %v743
    %v815 = vunpack.c.l.b16 %v744
    %v816 = vunpack.c.l.b16 %v745
    %v817 = vunpack.c.l.b16 %v746
    %v818 = vunpack.c.l.b16 %v747
    %v819 = vunpack.c.l.b16 %v748
    %v820 = vunpack.c.l.b16 %v749
    %v821 = vunpack.c.l.b16 %v750
    %v822 = vunpack.c.l.b16 %v751
    %v823 = vunpack.c.l.b16 %v752
    %v824 = vunpack.c.l.b16 %v753
    %v825 = vpack.c.b16 %v794, %v793
    %v826 = vpack.c.b16 %v796, %v795
    %v827 = vpack.c.b16 %v798, %v797
    %v828 = vpack.c.b16 %v800, %v799
    %v829 = vpack.c.b16 %v802, %v801
    %v830 = vpack.c.b16 %v804, %v803
    %v831 = vpack.c.b16 %v806, %v805
    %v832 = vpack.c.b16 %v808, %v807
    %v833 = vpack.c.b16 %v810, %v809
    %v834 = vpack.c.b16 %v812, %v811
    %v835 = vpack.c.b16 %v814, %v813
    %v836 = vpack.c.b16 %v816, %v815
    %v837 = vpack.c.b16 %v818, %v817
    %v838 = vpack.c.b16 %v820, %v819
    %v839 = vpack.c.b16 %v822, %v821
    %v840 = vpack.c.b16 %v824, %v823
    %857 = vmatprep.subr.bf16.mxu0 0
    %858 = vmatpush1.bf16.msra.mxu0 %v825
    %859 = vmatprep.subr.bf16.mxu0 0
    %860 = vmatpush1.bf16.msra.mxu0 %v826
    %861 = vmatprep.subr.bf16.mxu0 0
    %862 = vmatpush1.bf16.msra.mxu0 %v827
    %863 = vmatprep.subr.bf16.mxu0 0
    %864 = vmatpush1.bf16.msra.mxu0 %v828
    %865 = vmatprep.subr.bf16.mxu0 0
    %866 = vmatpush1.bf16.msra.mxu0 %v829
    %867 = vmatprep.subr.bf16.mxu0 0
    %868 = vmatpush1.bf16.msra.mxu0 %v830
    %869 = vmatprep.subr.bf16.mxu0 0
    %870 = vmatpush1.bf16.msra.mxu0 %v831
    %871 = vmatprep.subr.bf16.mxu0 0
    %872 = vmatpush1.bf16.msra.mxu0 %v832
    %873 = vmatprep.subr.bf16.mxu0 0
    %874 = vmatpush1.bf16.msra.mxu0 %v833
    %875 = vmatprep.subr.bf16.mxu0 0
    %876 = vmatpush1.bf16.msra.mxu0 %v834
    %877 = vmatprep.subr.bf16.mxu0 0
    %878 = vmatpush1.bf16.msra.mxu0 %v835
    %879 = vmatprep.subr.bf16.mxu0 0
    %880 = vmatpush1.bf16.msra.mxu0 %v836
    %881 = vmatprep.subr.bf16.mxu0 0
    %882 = vmatpush1.bf16.msra.mxu0 %v837
    %883 = vmatprep.subr.bf16.mxu0 0
    %884 = vmatpush1.bf16.msra.mxu0 %v838
    %885 = vmatprep.subr.bf16.mxu0 0
    %886 = vmatpush1.bf16.msra.mxu0 %v839
    %887 = vmatprep.subr.bf16.mxu0 0
    %888 = vmatpush1.bf16.msra.mxu0 %v840
    %889 = vmatprep.mubr.bf16.mxu0 %v721
    %890 = vmatmul.mubr.bf16.gmra.mrb[0].mxu0 %v720
    %v891 = vpop.f32.mrb[0].mxu0
    %v892 = vadd.f32 %v759, %v891
    %v893 = vpop.f32.mrb[0].mxu0
    %v894 = vpop.f32.mrb[0].mxu0
    %v895 = vpop.f32.mrb[0].mxu0
    %896 = vdwg.mxu0
    %897 = vst [vmem:[#allocation10] sm:$0xff] %v892
    // Predicated region
    $region46: #{tpu_custom_call.1} parent=1 // pred_check
      _
    $region47: #{tpu_custom_call.1} parent=1 // pred_check_branch
      %899 = sbr.rel (0) target = $region49
    $region48: #{tpu_custom_call.1} parent=1 // pred_region
      %s901 = ssub.s32 128, 128
      %902 = vsyncadd [#allocation4], %s901
      %s904 = sshll.u32 [#allocation10], 4
      %s905 = int_to_ptr.vmem [resolvable:$true] %s904
      %907 = dma.vmem_to_hbm [thread:$0]  %s905, 128, %s7, [#allocation4]
    $region49: #{tpu_custom_call.1} parent=1 // pred_fallthru
      _
    // Predicated region
    $region50: #{tpu_custom_call.1} parent=1 // pred_check
      _
    $region51: #{tpu_custom_call.1} parent=1 // pred_check_branch
      %909 = sbr.rel (0) target = $region53
    $region52: #{tpu_custom_call.1} parent=1 // pred_region
      %910 = dma.done [#allocation4], 128
    $region53: #{tpu_custom_call.1} parent=1 // pred_fallthru
      _
    %911 = vsyncpa [#allocation3], 1
    %912 = vsyncpa [#allocation6], 1
    %913 = vsyncpa [#allocation9], 1
    %914 = vsyncpa [#allocation4], 1

</llo_original>
